<compile_context>
chip_gen: v7x
topology: tpu7x:2x2x1
jax: 0.10.0
libtpu: 0.0.40
codegen_flags: <defaults>
</compile_context>

<pallas_src>
import jax
import jax.numpy as jnp
from jax import lax
from jax.experimental import pallas as pl
from jax.experimental.pallas import tpu as pltpu

BETA = 0.125
UPDATE_STEPS_MAX = 3
UPDATE_STEPS_EPS = 1e-5
UPDATE_STEPS_EPS_SQ = UPDATE_STEPS_EPS * UPDATE_STEPS_EPS
NORMALIZE_EPS = 1e-12            # F.normalize default eps
NORMALIZE_EPS_SQ = NORMALIZE_EPS * NORMALIZE_EPS

# dot_general dimension numbers: contract last dim of LHS with last dim of RHS
#   (T, D) x (M, D) -> (T, M)   i.e. q @ mem.T without materializing mem.T
_DN_TT = (((1,), (1,)), ((), ()))


def _hopfield_kernel(mem_ref, trg_ref, out_ref, q_ref, xi_prev_ref, done_ref):
    f32 = jnp.float32
    M, D = mem_ref.shape
    mem = mem_ref[...].astype(f32)            # (M, D) stored patterns (K == V), resident
    scale_lhs = D <= M                        # fold beta into the smaller operand (static)

    def association(q_cur):
        lhs = q_cur * BETA if scale_lhs else q_cur
        # (TT, D) x (M, D) -> (TT, M) on the MXU, transposed-RHS contraction
        s = lax.dot_general(lhs, mem, _DN_TT, preferred_element_type=f32)
        if not scale_lhs:
            s = s * BETA
        s = s - jnp.max(s, axis=-1, keepdims=True)
        e = jnp.exp(s)
        denom = jnp.sum(e, axis=-1, keepdims=True)          # (TT, 1)
        inv = pl.reciprocal(denom, approx=True)             # EUP slot (cheap)
        inv = inv * (2.0 - denom * inv)                     # 1 Newton step -> ~f32 accuracy
        return e * inv

    # ---- initial association + state update; establishes q == xi @ mem ----
    q0 = trg_ref[...].astype(f32)                           # (TT, D) state patterns
    xi0 = association(q0)                                   # (TT, M)
    q_ref[...] = jnp.dot(xi0, mem, preferred_element_type=f32)
    xi_prev_ref[...] = xi0
    done_ref[0] = jnp.int32(0)

    # ---- up to UPDATE_STEPS_MAX extra rounds, fully skipped once converged ----
    def _step(_, carry):
        @pl.when(done_ref[0] == 0)
        def _():
            xi_new = association(q_ref[...])
            diff_sq = jnp.sum((xi_new - xi_prev_ref[...]) ** 2)
            q_ref[...] = jnp.dot(xi_new, mem, preferred_element_type=f32)
            xi_prev_ref[...] = xi_new
            done_ref[0] = (diff_sq <= UPDATE_STEPS_EPS_SQ).astype(jnp.int32)
        return carry

    lax.fori_loop(0, UPDATE_STEPS_MAX, _step, 0, unroll=True)

    # retrieved == q by construction: no extra xi @ mem matmul needed.
    retrieved = q_ref[...]                                  # (TT, D)
    r_inv = lax.rsqrt(jnp.sum(retrieved * retrieved, axis=1, keepdims=True)
                      + NORMALIZE_EPS_SQ)
    m_inv = lax.rsqrt(jnp.sum(mem * mem, axis=1, keepdims=True)
                      + NORMALIZE_EPS_SQ)
    # pair_list tile = normalize(retrieved) @ normalize(mem).T   (TT, M)
    out_ref[...] = lax.dot_general(retrieved * r_inv, mem * m_inv, _DN_TT,
                                   preferred_element_type=f32)


def _pick_t_tile(T, M, D, vmem_budget=40 * 1024 * 1024):
    """Largest multiple-of-8 T tile whose f32 working set (resident memory block
    + double-buffered trg/out tiles + q/xi_prev scratch + temporaries) fits a
    conservative VMEM budget, safe on v5e / v6e / v7x."""
    resident = 2 * 4 * M * D               # memory block, conservatively x2 buffered
    per_row = 4 * (4 * M + 4 * D)          # trg/out (x2) + q/xi_prev + score temporaries
    avail = max(vmem_budget - resident, per_row * 8)
    tile = avail // max(per_row, 1)
    tile = max(8, min(1024, (tile // 8) * 8))
    t_sub = -(-T // 8) * 8                 # T rounded up to the f32 sublane multiple
    return min(tile, t_sub)


def hopfield_retrieval(memory, trg):
    """memory: (M, D) float, trg: (T, D) float -> pair_list: (T, M) float32."""
    M, D = memory.shape
    T, D2 = trg.shape
    assert D == D2, "feature dims of memory and trg must match"

    # For peak MXU / store-slot utilization, M and D should be multiples of 128.
    # TODO(synk): optional lane-padding of M with -inf score masking, and an
    # online-softmax M tiling for memories too large to keep VMEM-resident.
    t_tile = _pick_t_tile(T, M, D)
    t_pad = -(-T // t_tile) * t_tile
    trg_p = trg if t_pad == T else jnp.pad(trg, ((0, t_pad - T), (0, 0)))

    out = pl.pallas_call(
        _hopfield_kernel,
        out_shape=jax.ShapeDtypeStruct((t_pad, M), jnp.float32),
        grid_spec=pltpu.PrefetchScalarGridSpec(
            num_scalar_prefetch=0,
            grid=(t_pad // t_tile,),
            in_specs=[
                pl.BlockSpec((M, D), lambda i: (0, 0)),        # memory: VMEM-resident
                pl.BlockSpec((t_tile, D), lambda i: (i, 0)),   # trg: tiled over T
            ],
            out_specs=pl.BlockSpec((t_tile, M), lambda i: (i, 0)),
            scratch_shapes=[
                pltpu.VMEM((t_tile, D), jnp.float32),          # q (state patterns)
                pltpu.VMEM((t_tile, M), jnp.float32),          # xi_prev (for eps check)
                pltpu.SMEM((1,), jnp.int32),                   # converged flag
            ],
        ),
        compiler_params=pltpu.CompilerParams(
            dimension_semantics=("parallel",),     # T tiles independent -> 2 TCs on v7x
            vmem_limit_bytes=48 * 1024 * 1024,     # > scoped defaults, < v7x 64 MiB phys
        ),
    )(memory, trg_p)
    return out[:T]


def _reference(memory, trg):
    """Pure-JAX reference with the PyTorch module's semantics."""
    mem = memory.astype(jnp.float32)
    q = trg.astype(jnp.float32)

    def association(q_cur):
        return jax.nn.softmax(BETA * q_cur @ mem.T, axis=-1)

    xi = association(q)
    q = xi @ mem
    xi_old = xi
    active = jnp.bool_(True)
    for _ in range(UPDATE_STEPS_MAX):
        xi_new = association(q)
        xi = jnp.where(active, xi_new, xi)
        diff = jnp.sqrt(jnp.sum((xi_new - xi_old) ** 2))
        still_active = jnp.logical_and(active, diff > UPDATE_STEPS_EPS)
        q = jnp.where(active, xi_new @ mem, q)
        xi_old = jnp.where(active, xi_new, xi_old)
        active = still_active

    retrieved = xi @ mem
    r_norm = retrieved / jnp.maximum(
        jnp.linalg.norm(retrieved, axis=1, keepdims=True), NORMALIZE_EPS)
    m_norm = mem / jnp.maximum(
        jnp.linalg.norm(mem, axis=1, keepdims=True), NORMALIZE_EPS)
    return r_norm @ m_norm.T


if __name__ == "__main__":
    key = jax.random.PRNGKey(0)
    k_mem, k_trg = jax.random.split(key)
    M, T, D = 16, 8, 32
    memory = jax.random.normal(k_mem, (M, D), dtype=jnp.float32)
    trg = jax.random.normal(k_trg, (T, D), dtype=jnp.float32)

    pair_list = hopfield_retrieval(memory, trg)
    pair_list = jax.block_until_ready(pair_list)

    ref = _reference(memory, trg)
    assert pair_list.shape == (T, M)
    # Tolerance accounts for the EUP approximate-reciprocal (Newton-refined)
    # softmax denominator; everything else is f32-exact.
    assert jnp.allclose(pair_list, ref, atol=2e-4, rtol=2e-4), "mismatch vs reference"

    print("KERNEL_OK")
</pallas_src>

<mosaic_0001>
module attributes {stable_mosaic.version = 11 : i64} {
  func.func @_hopfield_kernel(%arg0: i32, %arg1: memref<16x32xf32, #tpu.memory_space<vmem>>, %arg2: memref<8x32xf32, #tpu.memory_space<vmem>>, %arg3: memref<8x16xf32, #tpu.memory_space<vmem>>, %arg4: memref<8x32xf32, #tpu.memory_space<vmem>>, %arg5: memref<8x16xf32, #tpu.memory_space<vmem>>, %arg6: memref<1xi32, #tpu.memory_space<smem>>) attributes {dimension_semantics = [#tpu.dimension_semantics<parallel>], iteration_bounds = array<i64: 1>, scalar_prefetch = 0 : i64, scratch_operands = 3 : i64, tpu.core_type = #tpu.core_type<tc>, window_params = [{pipeline_mode = #tpu.pipeline_mode<synchronous>, transform_indices = @transform_0, window_bounds = array<i64: 16, 32>}, {transform_indices = @transform_1, window_bounds = array<i64: 8, 32>}, {transform_indices = @transform_2, window_bounds = array<i64: 8, 16>}]} {
    %c0 = arith.constant 0 : index
    %c0_0 = arith.constant 0 : index
    %0 = vector.load %arg1[%c0, %c0_0] : memref<16x32xf32, #tpu.memory_space<vmem>>, vector<16x32xf32>
    %c0_1 = arith.constant 0 : index
    %c0_2 = arith.constant 0 : index
    %1 = vector.load %arg2[%c0_1, %c0_2] : memref<8x32xf32, #tpu.memory_space<vmem>>, vector<8x32xf32>
    %cst = arith.constant dense<0.000000e+00> : vector<8x16xf32>
    %2 = tpu.matmul %1, %0, %cst {dimension_numbers = #tpu.dot_dimension_numbers<[1], [1], [0], [0], [0, 0, 1, 0], [], []>} : vector<8x32xf32>, vector<16x32xf32>, vector<8x16xf32> -> vector<8x16xf32>
    %cst_3 = arith.constant 1.250000e-01 : f32
    %3 = vector.broadcast %cst_3 : f32 to vector<8x16xf32>
    %4 = arith.mulf %2, %3 : vector<8x16xf32>
    %cst_4 = arith.constant dense<0xFF800000> : vector<8xf32>
    %5 = vector.multi_reduction <maximumf>, %4, %cst_4 [1] : vector<8x16xf32> to vector<8xf32>
    %6 = vector.shape_cast %5 : vector<8xf32> to vector<8x1xf32>
    %7 = vector.broadcast %6 : vector<8x1xf32> to vector<8x16xf32>
    %8 = arith.subf %4, %7 : vector<8x16xf32>
    %9 = math.exp %8 : vector<8x16xf32>
    %cst_5 = arith.constant dense<0.000000e+00> : vector<8xf32>
    %10 = vector.multi_reduction <add>, %9, %cst_5 [1] : vector<8x16xf32> to vector<8xf32>
    %11 = vector.shape_cast %10 : vector<8xf32> to vector<8x1xf32>
    %12 = tpu.reciprocal %11 {approx = true} : vector<8x1xf32> -> vector<8x1xf32>
    %13 = arith.mulf %11, %12 : vector<8x1xf32>
    %cst_6 = arith.constant 2.000000e+00 : f32
    %14 = vector.broadcast %cst_6 : f32 to vector<8x1xf32>
    %15 = arith.subf %14, %13 : vector<8x1xf32>
    %16 = arith.mulf %12, %15 : vector<8x1xf32>
    %17 = vector.broadcast %16 : vector<8x1xf32> to vector<8x16xf32>
    %18 = arith.mulf %9, %17 : vector<8x16xf32>
    %cst_7 = arith.constant dense<0.000000e+00> : vector<8x32xf32>
    %19 = tpu.matmul %18, %0, %cst_7 {dimension_numbers = #tpu.dot_dimension_numbers<[1], [0], [0], [1], [0, 0, 1, 1], [], []>} : vector<8x16xf32>, vector<16x32xf32>, vector<8x32xf32> -> vector<8x32xf32>
    %c0_8 = arith.constant 0 : index
    %c0_9 = arith.constant 0 : index
    %20 = vector.load %arg4[%c0_8, %c0_9] : memref<8x32xf32, #tpu.memory_space<vmem>>, vector<8x32xf32>
    tpu.vector_store %arg4[%c0_8, %c0_9], %19 {strides = array<i32>} : memref<8x32xf32, #tpu.memory_space<vmem>>, vector<8x32xf32>,
    %c0_10 = arith.constant 0 : index
    %c0_11 = arith.constant 0 : index
    %21 = vector.load %arg5[%c0_10, %c0_11] : memref<8x16xf32, #tpu.memory_space<vmem>>, vector<8x16xf32>
    tpu.vector_store %arg5[%c0_10, %c0_11], %18 {strides = array<i32>} : memref<8x16xf32, #tpu.memory_space<vmem>>, vector<8x16xf32>,
    %c0_i32 = arith.constant 0 : i32
    %c0_12 = arith.constant 0 : index
    %22 = memref.load %arg6[%c0_12] : memref<1xi32, #tpu.memory_space<smem>>
    memref.store %c0_i32, %arg6[%c0_12] : memref<1xi32, #tpu.memory_space<smem>>
    %c0_i32_13 = arith.constant 0 : i32
    %c0_14 = arith.constant 0 : index
    %23 = memref.load %arg6[%c0_14] : memref<1xi32, #tpu.memory_space<smem>>
    %c0_i32_15 = arith.constant 0 : i32
    %24 = arith.cmpi eq, %23, %c0_i32_15 : i32
    %25 = arith.extui %24 : i1 to i32
    %c0_i32_16 = arith.constant 0 : i32
    %26 = arith.cmpi ne, %25, %c0_i32_16 : i32
    scf.if %26 {
      %c0_32 = arith.constant 0 : index
      %c0_33 = arith.constant 0 : index
      %54 = vector.load %arg4[%c0_32, %c0_33] : memref<8x32xf32, #tpu.memory_space<vmem>>, vector<8x32xf32>
      %cst_34 = arith.constant dense<0.000000e+00> : vector<8x16xf32>
      %55 = tpu.matmul %54, %0, %cst_34 {dimension_numbers = #tpu.dot_dimension_numbers<[1], [1], [0], [0], [0, 0, 1, 0], [], []>} : vector<8x32xf32>, vector<16x32xf32>, vector<8x16xf32> -> vector<8x16xf32>
      %cst_35 = arith.constant 1.250000e-01 : f32
      %56 = vector.broadcast %cst_35 : f32 to vector<8x16xf32>
      %57 = arith.mulf %55, %56 : vector<8x16xf32>
      %cst_36 = arith.constant dense<0xFF800000> : vector<8xf32>
      %58 = vector.multi_reduction <maximumf>, %57, %cst_36 [1] : vector<8x16xf32> to vector<8xf32>
      %59 = vector.shape_cast %58 : vector<8xf32> to vector<8x1xf32>
      %60 = vector.broadcast %59 : vector<8x1xf32> to vector<8x16xf32>
      %61 = arith.subf %57, %60 : vector<8x16xf32>
      %62 = math.exp %61 : vector<8x16xf32>
      %cst_37 = arith.constant dense<0.000000e+00> : vector<8xf32>
      %63 = vector.multi_reduction <add>, %62, %cst_37 [1] : vector<8x16xf32> to vector<8xf32>
      %64 = vector.shape_cast %63 : vector<8xf32> to vector<8x1xf32>
      %65 = tpu.reciprocal %64 {approx = true} : vector<8x1xf32> -> vector<8x1xf32>
      %66 = arith.mulf %64, %65 : vector<8x1xf32>
      %cst_38 = arith.constant 2.000000e+00 : f32
      %67 = vector.broadcast %cst_38 : f32 to vector<8x1xf32>
      %68 = arith.subf %67, %66 : vector<8x1xf32>
      %69 = arith.mulf %65, %68 : vector<8x1xf32>
      %70 = vector.broadcast %69 : vector<8x1xf32> to vector<8x16xf32>
      %71 = arith.mulf %62, %70 : vector<8x16xf32>
      %c0_39 = arith.constant 0 : index
      %c0_40 = arith.constant 0 : index
      %72 = vector.load %arg5[%c0_39, %c0_40] : memref<8x16xf32, #tpu.memory_space<vmem>>, vector<8x16xf32>
      %73 = arith.subf %71, %72 : vector<8x16xf32>
      %74 = arith.mulf %73, %73 : vector<8x16xf32>
      %75 = vector.shape_cast %74 : vector<8x16xf32> to vector<1x8x16xf32>
      %cst_41 = arith.constant dense<0.000000e+00> : vector<1xf32>
      %76 = vector.multi_reduction <add>, %75, %cst_41 [1, 2] : vector<1x8x16xf32> to vector<1xf32>
      %77 = vector.shape_cast %76 : vector<1xf32> to vector<1x1x1xf32>
      %78 = vector.extract %77[0, 0, 0] : f32 from vector<1x1x1xf32>
      %cst_42 = arith.constant dense<0.000000e+00> : vector<8x32xf32>
      %79 = tpu.matmul %71, %0, %cst_42 {dimension_numbers = #tpu.dot_dimension_numbers<[1], [0], [0], [1], [0, 0, 1, 1], [], []>} : vector<8x16xf32>, vector<16x32xf32>, vector<8x32xf32> -> vector<8x32xf32>
      %c0_43 = arith.constant 0 : index
      %c0_44 = arith.constant 0 : index
      %80 = vector.load %arg4[%c0_43, %c0_44] : memref<8x32xf32, #tpu.memory_space<vmem>>, vector<8x32xf32>
      tpu.vector_store %arg4[%c0_43, %c0_44], %79 {strides = array<i32>} : memref<8x32xf32, #tpu.memory_space<vmem>>, vector<8x32xf32>,
      %c0_45 = arith.constant 0 : index
      %c0_46 = arith.constant 0 : index
      %81 = vector.load %arg5[%c0_45, %c0_46] : memref<8x16xf32, #tpu.memory_space<vmem>>, vector<8x16xf32>
      tpu.vector_store %arg5[%c0_45, %c0_46], %71 {strides = array<i32>} : memref<8x16xf32, #tpu.memory_space<vmem>>, vector<8x16xf32>,
      %cst_47 = arith.constant 1.000000e-10 : f32
      %82 = arith.cmpf ole, %78, %cst_47 : f32
      %83 = arith.extui %82 : i1 to i32
      %c0_48 = arith.constant 0 : index
      %84 = memref.load %arg6[%c0_48] : memref<1xi32, #tpu.memory_space<smem>>
      memref.store %83, %arg6[%c0_48] : memref<1xi32, #tpu.memory_space<smem>>
    } else {
    }
    %c1_i32 = arith.constant 1 : i32
    %c0_17 = arith.constant 0 : index
    %27 = memref.load %arg6[%c0_17] : memref<1xi32, #tpu.memory_space<smem>>
    %c0_i32_18 = arith.constant 0 : i32
    %28 = arith.cmpi eq, %27, %c0_i32_18 : i32
    %29 = arith.extui %28 : i1 to i32
    %c0_i32_19 = arith.constant 0 : i32
    %30 = arith.cmpi ne, %29, %c0_i32_19 : i32
    scf.if %30 {
      %c0_32 = arith.constant 0 : index
      %c0_33 = arith.constant 0 : index
      %54 = vector.load %arg4[%c0_32, %c0_33] : memref<8x32xf32, #tpu.memory_space<vmem>>, vector<8x32xf32>
      %cst_34 = arith.constant dense<0.000000e+00> : vector<8x16xf32>
      %55 = tpu.matmul %54, %0, %cst_34 {dimension_numbers = #tpu.dot_dimension_numbers<[1], [1], [0], [0], [0, 0, 1, 0], [], []>} : vector<8x32xf32>, vector<16x32xf32>, vector<8x16xf32> -> vector<8x16xf32>
      %cst_35 = arith.constant 1.250000e-01 : f32
      %56 = vector.broadcast %cst_35 : f32 to vector<8x16xf32>
      %57 = arith.mulf %55, %56 : vector<8x16xf32>
      %cst_36 = arith.constant dense<0xFF800000> : vector<8xf32>
      %58 = vector.multi_reduction <maximumf>, %57, %cst_36 [1] : vector<8x16xf32> to vector<8xf32>
      %59 = vector.shape_cast %58 : vector<8xf32> to vector<8x1xf32>
      %60 = vector.broadcast %59 : vector<8x1xf32> to vector<8x16xf32>
      %61 = arith.subf %57, %60 : vector<8x16xf32>
      %62 = math.exp %61 : vector<8x16xf32>
      %cst_37 = arith.constant dense<0.000000e+00> : vector<8xf32>
      %63 = vector.multi_reduction <add>, %62, %cst_37 [1] : vector<8x16xf32> to vector<8xf32>
      %64 = vector.shape_cast %63 : vector<8xf32> to vector<8x1xf32>
      %65 = tpu.reciprocal %64 {approx = true} : vector<8x1xf32> -> vector<8x1xf32>
      %66 = arith.mulf %64, %65 : vector<8x1xf32>
      %cst_38 = arith.constant 2.000000e+00 : f32
      %67 = vector.broadcast %cst_38 : f32 to vector<8x1xf32>
      %68 = arith.subf %67, %66 : vector<8x1xf32>
      %69 = arith.mulf %65, %68 : vector<8x1xf32>
      %70 = vector.broadcast %69 : vector<8x1xf32> to vector<8x16xf32>
      %71 = arith.mulf %62, %70 : vector<8x16xf32>
      %c0_39 = arith.constant 0 : index
      %c0_40 = arith.constant 0 : index
      %72 = vector.load %arg5[%c0_39, %c0_40] : memref<8x16xf32, #tpu.memory_space<vmem>>, vector<8x16xf32>
      %73 = arith.subf %71, %72 : vector<8x16xf32>
      %74 = arith.mulf %73, %73 : vector<8x16xf32>
      %75 = vector.shape_cast %74 : vector<8x16xf32> to vector<1x8x16xf32>
      %cst_41 = arith.constant dense<0.000000e+00> : vector<1xf32>
      %76 = vector.multi_reduction <add>, %75, %cst_41 [1, 2] : vector<1x8x16xf32> to vector<1xf32>
      %77 = vector.shape_cast %76 : vector<1xf32> to vector<1x1x1xf32>
      %78 = vector.extract %77[0, 0, 0] : f32 from vector<1x1x1xf32>
      %cst_42 = arith.constant dense<0.000000e+00> : vector<8x32xf32>
      %79 = tpu.matmul %71, %0, %cst_42 {dimension_numbers = #tpu.dot_dimension_numbers<[1], [0], [0], [1], [0, 0, 1, 1], [], []>} : vector<8x16xf32>, vector<16x32xf32>, vector<8x32xf32> -> vector<8x32xf32>
      %c0_43 = arith.constant 0 : index
      %c0_44 = arith.constant 0 : index
      %80 = vector.load %arg4[%c0_43, %c0_44] : memref<8x32xf32, #tpu.memory_space<vmem>>, vector<8x32xf32>
      tpu.vector_store %arg4[%c0_43, %c0_44], %79 {strides = array<i32>} : memref<8x32xf32, #tpu.memory_space<vmem>>, vector<8x32xf32>,
      %c0_45 = arith.constant 0 : index
      %c0_46 = arith.constant 0 : index
      %81 = vector.load %arg5[%c0_45, %c0_46] : memref<8x16xf32, #tpu.memory_space<vmem>>, vector<8x16xf32>
      tpu.vector_store %arg5[%c0_45, %c0_46], %71 {strides = array<i32>} : memref<8x16xf32, #tpu.memory_space<vmem>>, vector<8x16xf32>,
      %cst_47 = arith.constant 1.000000e-10 : f32
      %82 = arith.cmpf ole, %78, %cst_47 : f32
      %83 = arith.extui %82 : i1 to i32
      %c0_48 = arith.constant 0 : index
      %84 = memref.load %arg6[%c0_48] : memref<1xi32, #tpu.memory_space<smem>>
      memref.store %83, %arg6[%c0_48] : memref<1xi32, #tpu.memory_space<smem>>
    } else {
    }
    %c2_i32 = arith.constant 2 : i32
    %c0_20 = arith.constant 0 : index
    %31 = memref.load %arg6[%c0_20] : memref<1xi32, #tpu.memory_space<smem>>
    %c0_i32_21 = arith.constant 0 : i32
    %32 = arith.cmpi eq, %31, %c0_i32_21 : i32
    %33 = arith.extui %32 : i1 to i32
    %c0_i32_22 = arith.constant 0 : i32
    %34 = arith.cmpi ne, %33, %c0_i32_22 : i32
    scf.if %34 {
      %c0_32 = arith.constant 0 : index
      %c0_33 = arith.constant 0 : index
      %54 = vector.load %arg4[%c0_32, %c0_33] : memref<8x32xf32, #tpu.memory_space<vmem>>, vector<8x32xf32>
      %cst_34 = arith.constant dense<0.000000e+00> : vector<8x16xf32>
      %55 = tpu.matmul %54, %0, %cst_34 {dimension_numbers = #tpu.dot_dimension_numbers<[1], [1], [0], [0], [0, 0, 1, 0], [], []>} : vector<8x32xf32>, vector<16x32xf32>, vector<8x16xf32> -> vector<8x16xf32>
      %cst_35 = arith.constant 1.250000e-01 : f32
      %56 = vector.broadcast %cst_35 : f32 to vector<8x16xf32>
      %57 = arith.mulf %55, %56 : vector<8x16xf32>
      %cst_36 = arith.constant dense<0xFF800000> : vector<8xf32>
      %58 = vector.multi_reduction <maximumf>, %57, %cst_36 [1] : vector<8x16xf32> to vector<8xf32>
      %59 = vector.shape_cast %58 : vector<8xf32> to vector<8x1xf32>
      %60 = vector.broadcast %59 : vector<8x1xf32> to vector<8x16xf32>
      %61 = arith.subf %57, %60 : vector<8x16xf32>
      %62 = math.exp %61 : vector<8x16xf32>
      %cst_37 = arith.constant dense<0.000000e+00> : vector<8xf32>
      %63 = vector.multi_reduction <add>, %62, %cst_37 [1] : vector<8x16xf32> to vector<8xf32>
      %64 = vector.shape_cast %63 : vector<8xf32> to vector<8x1xf32>
      %65 = tpu.reciprocal %64 {approx = true} : vector<8x1xf32> -> vector<8x1xf32>
      %66 = arith.mulf %64, %65 : vector<8x1xf32>
      %cst_38 = arith.constant 2.000000e+00 : f32
      %67 = vector.broadcast %cst_38 : f32 to vector<8x1xf32>
      %68 = arith.subf %67, %66 : vector<8x1xf32>
      %69 = arith.mulf %65, %68 : vector<8x1xf32>
      %70 = vector.broadcast %69 : vector<8x1xf32> to vector<8x16xf32>
      %71 = arith.mulf %62, %70 : vector<8x16xf32>
      %c0_39 = arith.constant 0 : index
      %c0_40 = arith.constant 0 : index
      %72 = vector.load %arg5[%c0_39, %c0_40] : memref<8x16xf32, #tpu.memory_space<vmem>>, vector<8x16xf32>
      %73 = arith.subf %71, %72 : vector<8x16xf32>
      %74 = arith.mulf %73, %73 : vector<8x16xf32>
      %75 = vector.shape_cast %74 : vector<8x16xf32> to vector<1x8x16xf32>
      %cst_41 = arith.constant dense<0.000000e+00> : vector<1xf32>
      %76 = vector.multi_reduction <add>, %75, %cst_41 [1, 2] : vector<1x8x16xf32> to vector<1xf32>
      %77 = vector.shape_cast %76 : vector<1xf32> to vector<1x1x1xf32>
      %78 = vector.extract %77[0, 0, 0] : f32 from vector<1x1x1xf32>
      %cst_42 = arith.constant dense<0.000000e+00> : vector<8x32xf32>
      %79 = tpu.matmul %71, %0, %cst_42 {dimension_numbers = #tpu.dot_dimension_numbers<[1], [0], [0], [1], [0, 0, 1, 1], [], []>} : vector<8x16xf32>, vector<16x32xf32>, vector<8x32xf32> -> vector<8x32xf32>
      %c0_43 = arith.constant 0 : index
      %c0_44 = arith.constant 0 : index
      %80 = vector.load %arg4[%c0_43, %c0_44] : memref<8x32xf32, #tpu.memory_space<vmem>>, vector<8x32xf32>
      tpu.vector_store %arg4[%c0_43, %c0_44], %79 {strides = array<i32>} : memref<8x32xf32, #tpu.memory_space<vmem>>, vector<8x32xf32>,
      %c0_45 = arith.constant 0 : index
      %c0_46 = arith.constant 0 : index
      %81 = vector.load %arg5[%c0_45, %c0_46] : memref<8x16xf32, #tpu.memory_space<vmem>>, vector<8x16xf32>
      tpu.vector_store %arg5[%c0_45, %c0_46], %71 {strides = array<i32>} : memref<8x16xf32, #tpu.memory_space<vmem>>, vector<8x16xf32>,
      %cst_47 = arith.constant 1.000000e-10 : f32
      %82 = arith.cmpf ole, %78, %cst_47 : f32
      %83 = arith.extui %82 : i1 to i32
      %c0_48 = arith.constant 0 : index
      %84 = memref.load %arg6[%c0_48] : memref<1xi32, #tpu.memory_space<smem>>
      memref.store %83, %arg6[%c0_48] : memref<1xi32, #tpu.memory_space<smem>>
    } else {
    }
    %c0_23 = arith.constant 0 : index
    %c0_24 = arith.constant 0 : index
    %35 = vector.load %arg4[%c0_23, %c0_24] : memref<8x32xf32, #tpu.memory_space<vmem>>, vector<8x32xf32>
    %36 = arith.mulf %35, %35 : vector<8x32xf32>
    %cst_25 = arith.constant dense<0.000000e+00> : vector<8xf32>
    %37 = vector.multi_reduction <add>, %36, %cst_25 [1] : vector<8x32xf32> to vector<8xf32>
    %38 = vector.shape_cast %37 : vector<8xf32> to vector<8x1xf32>
    %cst_26 = arith.constant 1.000000e-24 : f32
    %39 = vector.broadcast %cst_26 : f32 to vector<8x1xf32>
    %40 = arith.addf %38, %39 : vector<8x1xf32>
    %41 = math.rsqrt %40 : vector<8x1xf32>
    %42 = arith.mulf %0, %0 : vector<16x32xf32>
    %cst_27 = arith.constant dense<0.000000e+00> : vector<16xf32>
    %43 = vector.multi_reduction <add>, %42, %cst_27 [1] : vector<16x32xf32> to vector<16xf32>
    %44 = vector.shape_cast %43 : vector<16xf32> to vector<16x1xf32>
    %cst_28 = arith.constant 1.000000e-24 : f32
    %45 = vector.broadcast %cst_28 : f32 to vector<16x1xf32>
    %46 = arith.addf %44, %45 : vector<16x1xf32>
    %47 = math.rsqrt %46 : vector<16x1xf32>
    %48 = vector.broadcast %41 : vector<8x1xf32> to vector<8x32xf32>
    %49 = arith.mulf %35, %48 : vector<8x32xf32>
    %50 = vector.broadcast %47 : vector<16x1xf32> to vector<16x32xf32>
    %51 = arith.mulf %0, %50 : vector<16x32xf32>
    %cst_29 = arith.constant dense<0.000000e+00> : vector<8x16xf32>
    %52 = tpu.matmul %49, %51, %cst_29 {dimension_numbers = #tpu.dot_dimension_numbers<[1], [1], [0], [0], [0, 0, 1, 0], [], []>} : vector<8x32xf32>, vector<16x32xf32>, vector<8x16xf32> -> vector<8x16xf32>
    %c0_30 = arith.constant 0 : index
    %c0_31 = arith.constant 0 : index
    %53 = vector.load %arg3[%c0_30, %c0_31] : memref<8x16xf32, #tpu.memory_space<vmem>>, vector<8x16xf32>
    tpu.vector_store %arg3[%c0_30, %c0_31], %52 {strides = array<i32>} : memref<8x16xf32, #tpu.memory_space<vmem>>, vector<8x16xf32>,
    return
  }
  func.func @transform_0(%arg0: i32) -> (i32, i32) {
    %c0_i32 = arith.constant 0 : i32
    %c0_i32_0 = arith.constant 0 : i32
    %c0_i32_1 = arith.constant 0 : i32
    return %c0_i32, %c0_i32_0 : i32, i32
  }
  func.func @transform_1(%arg0: i32) -> (i32, i32) {
    %c0_i32 = arith.constant 0 : i32
    %c0_i32_0 = arith.constant 0 : i32
    return %arg0, %c0_i32 : i32, i32
  }
  func.func @transform_2(%arg0: i32) -> (i32, i32) {
    %c0_i32 = arith.constant 0 : i32
    %c0_i32_0 = arith.constant 0 : i32
    return %arg0, %c0_i32 : i32, i32
  }
}

</mosaic_0001>

<llo_original>
// kernel: tpu_custom_call.1
$region0: #{tpu_custom_call.1}
  #allocation0 [shape = 'u32[]', space=smem, size = 0x4, offset = 0x4, fixed_abs, tag = 'smem constant byte address 0x4 - core index']
  #allocation1 [shape = 'u32[144,128]{1,0:T(1,128)}', space=vmem, size = 0x12000, scoped, tag = 'internal scratch']
  #allocation2 [shape = 'f32[8,32]{1,0:T(8,128)}', space=vmem, size = 0x1000, scoped, tag = 'scratch operand']
  #allocation3 [shape = 'f32[8,16]{1,0:T(8,128)}', space=vmem, size = 0x1000, scoped, tag = 'scratch operand']
  #allocation4 [shape = 's32[1]{0:T(128)}', space=smem, size = 0x200, scoped, tag = 'scratch operand']
  %s0 = inlined_call_operand.hbm [shape: f32[16,32], index: 0, kind: input, shape index: {}]
  %s1 = inlined_call_operand.hbm [shape: f32[8,32], index: 1, kind: input, shape index: {}]
  %s2 = inlined_call_operand.hbm [shape: f32[8,16], index: 2, kind: output, shape index: {}]
  %s3 = sld [smem:[#allocation0]]
  $region38: #{tpu_custom_call.1} parent=0
    _
  %s5 = ssub.s32 1, %s3
  %s6 = scalar_select 0, %s5, %s3
  $region1: #{tpu_custom_call.1} parent=0
    #allocation5 [shape = 'u8[8192]{0}', space=vmem, size = 0x2000, scoped, tag = 'input window, operand 0, single buffered']
    #allocation6 [shape = 's32[1]{0}', space=sflag, size = 0x4, scoped, tag = 'scoped memory for tpu_custom_call.1']
    #allocation7 [shape = 's32[1]{0}', space=sflag, size = 0x4, scoped, tag = 'scoped memory for tpu_custom_call.1']
    #allocation8 [shape = 'u8[4096]{0}', space=vmem, size = 0x1000, scoped, tag = 'input window, operand 1, single buffered']
    #allocation9 [shape = 's32[1]{0}', space=sflag, size = 0x4, scoped, tag = 'scoped memory for tpu_custom_call.1']
    #allocation10 [shape = 'u8[4096]{0}', space=vmem, size = 0x1000, scoped, tag = 'output window, operand 0, single buffered']
    %7 = vsyncpa [#allocation6], 0
    %8 = vsyncpa [#allocation9], 0
    %9 = vsyncpa [#allocation7], 0
    // Predicated region
    $region2: #{tpu_custom_call.1} parent=1 // pred_check
      _
    $region3: #{tpu_custom_call.1} parent=1 // pred_check_branch
      %11 = sbr.rel (0) target = $region5
    $region4: #{tpu_custom_call.1} parent=1 // pred_region
      %s13 = ssub.s32 256, 256
      %14 = vsyncadd [#allocation6], %s13
      %s15 = sshll.u32 [#allocation5], 4
      %s16 = int_to_ptr.vmem [resolvable:$true] %s15
      %21 = dma.hbm_to_vmem [thread:$0]  %s0, 256, %s16, [#allocation6], 128, 128, 8
    $region5: #{tpu_custom_call.1} parent=1 // pred_fallthru
      _
    // Predicated region
    $region6: #{tpu_custom_call.1} parent=1 // pred_check
      _
    $region7: #{tpu_custom_call.1} parent=1 // pred_check_branch
      %23 = sbr.rel (0) target = $region9
    $region8: #{tpu_custom_call.1} parent=1 // pred_region
      %s25 = ssub.s32 128, 128
      %26 = vsyncadd [#allocation9], %s25
      %s28 = sshll.u32 [#allocation8], 4
      %s29 = int_to_ptr.vmem [resolvable:$true] %s28
      %31 = dma.hbm_to_vmem [thread:$0]  %s1, 128, %s29, [#allocation9]
    $region9: #{tpu_custom_call.1} parent=1 // pred_fallthru
      _
    // Predicated region
    $region10: #{tpu_custom_call.1} parent=1 // pred_check
      _
    $region11: #{tpu_custom_call.1} parent=1 // pred_check_branch
      %33 = sbr.rel (0) target = $region13
    $region12: #{tpu_custom_call.1} parent=1 // pred_region
      %34 = dma.done [#allocation6], 256
    $region13: #{tpu_custom_call.1} parent=1 // pred_fallthru
      _
    // Predicated region
    $region14: #{tpu_custom_call.1} parent=1 // pred_check
      _
    $region15: #{tpu_custom_call.1} parent=1 // pred_check_branch
      %36 = sbr.rel (0) target = $region17
    $region16: #{tpu_custom_call.1} parent=1 // pred_region
      %37 = dma.done [#allocation9], 128
    $region17: #{tpu_custom_call.1} parent=1 // pred_fallthru
      _
    %v38 = vld [vmem:[#allocation5] sm:$0xff]
    %v39 = vld [vmem:[#allocation5 + $0x8] sm:$0xff]
    %v40 = vld [vmem:[#allocation8] sm:$0xff]
    %vm41 = vcmask 261120
    %v43 = vsel %vm41, %v40, 0
    %v46 = vsel %vm41, %v38, 0
    %v49 = vsel %vm41, %v39, 0
    %51 = vmatprep.subr.mxu0 0.0
    %52 = vmatpush1.xpose.msra.mxu0 %v46
    %53 = vmatprep.subr.mxu0 0.0
    %54 = vmatpush1.xpose.msra.mxu0 %v49
    %55 = vmatprep.subr.mxu0 0.0
    %56 = vmatpush1.xpose.msra.mxu0 0.0
    %57 = vmatprep.subr.mxu0 0.0
    %58 = vmatpush1.xpose.msra.mxu0 0.0
    %59 = vmatprep.subr.mxu0 0.0
    %60 = vmatpush1.xpose.msra.mxu0 0.0
    %61 = vmatprep.subr.mxu0 0.0
    %62 = vmatpush1.xpose.msra.mxu0 0.0
    %63 = vmatprep.subr.mxu0 0.0
    %64 = vmatpush1.xpose.msra.mxu0 0.0
    %65 = vmatprep.subr.mxu0 0.0
    %66 = vmatpush1.xpose.msra.mxu0 0.0
    %67 = vmatprep.subr.mxu0 0.0
    %68 = vmatpush1.xpose.msra.mxu0 0.0
    %69 = vmatprep.subr.mxu0 0.0
    %70 = vmatpush1.xpose.msra.mxu0 0.0
    %71 = vmatprep.subr.mxu0 0.0
    %72 = vmatpush1.xpose.msra.mxu0 0.0
    %73 = vmatprep.subr.mxu0 0.0
    %74 = vmatpush1.xpose.msra.mxu0 0.0
    %75 = vmatprep.subr.mxu0 0.0
    %76 = vmatpush1.xpose.msra.mxu0 0.0
    %77 = vmatprep.subr.mxu0 0.0
    %78 = vmatpush1.xpose.msra.mxu0 0.0
    %79 = vmatprep.subr.mxu0 0.0
    %80 = vmatpush1.xpose.msra.mxu0 0.0
    %81 = vmatprep.subr.mxu0 0.0
    %82 = vmatpush1.xpose.msra.mxu0 0.0
    %83 = vmatprep.subr.mxu0 0.0
    %84 = vmatpush1.xpose.msra.mxu0 0.0
    %85 = vmatprep.subr.mxu0 0.0
    %86 = vmatpush1.xpose.msra.mxu0 0.0
    %87 = vmatprep.subr.mxu0 0.0
    %88 = vmatpush1.xpose.msra.mxu0 0.0
    %89 = vmatprep.subr.mxu0 0.0
    %90 = vmatpush1.xpose.msra.mxu0 0.0
    %91 = vmatprep.subr.mxu0 0.0
    %92 = vmatpush1.xpose.msra.mxu0 0.0
    %93 = vmatprep.subr.mxu0 0.0
    %94 = vmatpush1.xpose.msra.mxu0 0.0
    %95 = vmatprep.subr.mxu0 0.0
    %96 = vmatpush1.xpose.msra.mxu0 0.0
    %97 = vmatprep.subr.mxu0 0.0
    %98 = vmatpush1.xpose.msra.mxu0 0.0
    %99 = vmatprep.subr.mxu0 0.0
    %100 = vmatpush1.xpose.msra.mxu0 0.0
    %101 = vmatprep.subr.mxu0 0.0
    %102 = vmatpush1.xpose.msra.mxu0 0.0
    %103 = vmatprep.subr.mxu0 0.0
    %104 = vmatpush1.xpose.msra.mxu0 0.0
    %105 = vmatprep.subr.mxu0 0.0
    %106 = vmatpush1.xpose.msra.mxu0 0.0
    %107 = vmatprep.subr.mxu0 0.0
    %108 = vmatpush1.xpose.msra.mxu0 0.0
    %109 = vmatprep.subr.mxu0 0.0
    %110 = vmatpush1.xpose.msra.mxu0 0.0
    %111 = vmatprep.subr.mxu0 0.0
    %112 = vmatpush1.xpose.msra.mxu0 0.0
    %113 = vmatprep.subr.mxu0 0.0
    %114 = vmatpush1.xpose.msra.mxu0 0.0
    %115 = vmatprep.mubr.f32.mxu0 0.0
    %116 = vmatmul.mubr.f32.gmra.mrb[0].mxu0 %v43
    %v117 = vpop.f32.mrb[0].mxu0
    %v118 = vadd.f32 0.0, %v117
    %v119 = vpop.f32.mrb[0].mxu0
    %120 = vdwg.mxu0
    %v121 = vmul.f32 %v118, 0.125
    %vm122 = vcmask 130048
    %v123 = vsel %vm122, %v121, -inf
    %124 = vmax.xlane.f32.xlu0 %v123
    %v125 = vpop.xlane.xlu0 %124
    %v126 = vsub.f32 %v121, %v125
    %v127 = vmul.f32 %v126, 1.442695
    %v128 = vpow.pop %v127
    %v129 = vsel %vm122, %v128, 0.0
    %130 = vadd.xlane.f32.xlu0 %v129
    %v131 = vpop.xlane.xlu0 %130
    %v132 = vrcp.pop %v131
    %v133 = vmul.f32 %v131, %v132
    %v134 = vsub.f32 2.0, %v133
    %v135 = vmul.f32 %v132, %v134
    %v136 = vmul.f32 %v128, %v135
    %v138 = vsel %vm122, %v136, 0
    %140 = vmatprep.subr.mxu0 0.0
    %141 = vmatpush1.msra.mxu0 %v38
    %142 = vmatprep.subr.mxu0 0.0
    %143 = vmatpush1.msra.mxu0 %v39
    %144 = vmatprep.subr.mxu0 0.0
    %145 = vmatpush1.msra.mxu0 0.0
    %146 = vmatprep.subr.mxu0 0.0
    %147 = vmatpush1.msra.mxu0 0.0
    %148 = vmatprep.subr.mxu0 0.0
    %149 = vmatpush1.msra.mxu0 0.0
    %150 = vmatprep.subr.mxu0 0.0
    %151 = vmatpush1.msra.mxu0 0.0
    %152 = vmatprep.subr.mxu0 0.0
    %153 = vmatpush1.msra.mxu0 0.0
    %154 = vmatprep.subr.mxu0 0.0
    %155 = vmatpush1.msra.mxu0 0.0
    %156 = vmatprep.subr.mxu0 0.0
    %157 = vmatpush1.msra.mxu0 0.0
    %158 = vmatprep.subr.mxu0 0.0
    %159 = vmatpush1.msra.mxu0 0.0
    %160 = vmatprep.subr.mxu0 0.0
    %161 = vmatpush1.msra.mxu0 0.0
    %162 = vmatprep.subr.mxu0 0.0
    %163 = vmatpush1.msra.mxu0 0.0
    %164 = vmatprep.subr.mxu0 0.0
    %165 = vmatpush1.msra.mxu0 0.0
    %166 = vmatprep.subr.mxu0 0.0
    %167 = vmatpush1.msra.mxu0 0.0
    %168 = vmatprep.subr.mxu0 0.0
    %169 = vmatpush1.msra.mxu0 0.0
    %170 = vmatprep.subr.mxu0 0.0
    %171 = vmatpush1.msra.mxu0 0.0
    %172 = vmatprep.subr.mxu0 0.0
    %173 = vmatpush1.msra.mxu0 0.0
    %174 = vmatprep.subr.mxu0 0.0
    %175 = vmatpush1.msra.mxu0 0.0
    %176 = vmatprep.subr.mxu0 0.0
    %177 = vmatpush1.msra.mxu0 0.0
    %178 = vmatprep.subr.mxu0 0.0
    %179 = vmatpush1.msra.mxu0 0.0
    %180 = vmatprep.subr.mxu0 0.0
    %181 = vmatpush1.msra.mxu0 0.0
    %182 = vmatprep.subr.mxu0 0.0
    %183 = vmatpush1.msra.mxu0 0.0
    %184 = vmatprep.subr.mxu0 0.0
    %185 = vmatpush1.msra.mxu0 0.0
    %186 = vmatprep.subr.mxu0 0.0
    %187 = vmatpush1.msra.mxu0 0.0
    %188 = vmatprep.subr.mxu0 0.0
    %189 = vmatpush1.msra.mxu0 0.0
    %190 = vmatprep.subr.mxu0 0.0
    %191 = vmatpush1.msra.mxu0 0.0
    %192 = vmatprep.subr.mxu0 0.0
    %193 = vmatpush1.msra.mxu0 0.0
    %194 = vmatprep.subr.mxu0 0.0
    %195 = vmatpush1.msra.mxu0 0.0
    %196 = vmatprep.subr.mxu0 0.0
    %197 = vmatpush1.msra.mxu0 0.0
    %198 = vmatprep.subr.mxu0 0.0
    %199 = vmatpush1.msra.mxu0 0.0
    %200 = vmatprep.subr.mxu0 0.0
    %201 = vmatpush1.msra.mxu0 0.0
    %202 = vmatprep.subr.mxu0 0.0
    %203 = vmatpush1.msra.mxu0 0.0
    %204 = vmatprep.mubr.f32.mxu0 0.0
    %205 = vmatmul.mubr.f32.gmra.mrb[0].mxu0 %v138
    %v206 = vpop.f32.mrb[0].mxu0
    %v207 = vadd.f32 0.0, %v206
    %v208 = vpop.f32.mrb[0].mxu0
    %209 = vdwg.mxu0
    %210 = vst.msk [vmem:[#allocation2] sm:$0xff] %vm41, %v207
    %211 = vst.msk [vmem:[#allocation3] sm:$0xff] %vm122, %v136
    %s212 = scalar_lea.smem [#allocation4], 0
    %213 = sst [smem:[%s212]] 0
    %s214 = sld [smem:[#allocation4]]
    %p215 = scmp.eq.s32.totalorder %s214, 0
    // Predicated region
    $region18: #{tpu_custom_call.1} parent=1 // pred_check
      %p216 = pneg %p215
    $region19: #{tpu_custom_call.1} parent=1 // pred_check_branch
      %218 = sbr.rel (%p216) target = $region21
    $region20: #{tpu_custom_call.1} parent=1 // pred_region
      %v219 = vld [vmem:[#allocation2] sm:$0xff]
      %v221 = vsel %vm41, %v219, 0
      %223 = vmatprep.subr.mxu0 0.0
      %224 = vmatpush1.xpose.msra.mxu0 %v46
      %225 = vmatprep.subr.mxu0 0.0
      %226 = vmatpush1.xpose.msra.mxu0 %v49
      %227 = vmatprep.subr.mxu0 0.0
      %228 = vmatpush1.xpose.msra.mxu0 0.0
      %229 = vmatprep.subr.mxu0 0.0
      %230 = vmatpush1.xpose.msra.mxu0 0.0
      %231 = vmatprep.subr.mxu0 0.0
      %232 = vmatpush1.xpose.msra.mxu0 0.0
      %233 = vmatprep.subr.mxu0 0.0
      %234 = vmatpush1.xpose.msra.mxu0 0.0
      %235 = vmatprep.subr.mxu0 0.0
      %236 = vmatpush1.xpose.msra.mxu0 0.0
      %237 = vmatprep.subr.mxu0 0.0
      %238 = vmatpush1.xpose.msra.mxu0 0.0
      %239 = vmatprep.subr.mxu0 0.0
      %240 = vmatpush1.xpose.msra.mxu0 0.0
      %241 = vmatprep.subr.mxu0 0.0
      %242 = vmatpush1.xpose.msra.mxu0 0.0
      %243 = vmatprep.subr.mxu0 0.0
      %244 = vmatpush1.xpose.msra.mxu0 0.0
      %245 = vmatprep.subr.mxu0 0.0
      %246 = vmatpush1.xpose.msra.mxu0 0.0
      %247 = vmatprep.subr.mxu0 0.0
      %248 = vmatpush1.xpose.msra.mxu0 0.0
      %249 = vmatprep.subr.mxu0 0.0
      %250 = vmatpush1.xpose.msra.mxu0 0.0
      %251 = vmatprep.subr.mxu0 0.0
      %252 = vmatpush1.xpose.msra.mxu0 0.0
      %253 = vmatprep.subr.mxu0 0.0
      %254 = vmatpush1.xpose.msra.mxu0 0.0
      %255 = vmatprep.subr.mxu0 0.0
      %256 = vmatpush1.xpose.msra.mxu0 0.0
      %257 = vmatprep.subr.mxu0 0.0
      %258 = vmatpush1.xpose.msra.mxu0 0.0
      %259 = vmatprep.subr.mxu0 0.0
      %260 = vmatpush1.xpose.msra.mxu0 0.0
      %261 = vmatprep.subr.mxu0 0.0
      %262 = vmatpush1.xpose.msra.mxu0 0.0
      %263 = vmatprep.subr.mxu0 0.0
      %264 = vmatpush1.xpose.msra.mxu0 0.0
      %265 = vmatprep.subr.mxu0 0.0
      %266 = vmatpush1.xpose.msra.mxu0 0.0
      %267 = vmatprep.subr.mxu0 0.0
      %268 = vmatpush1.xpose.msra.mxu0 0.0
      %269 = vmatprep.subr.mxu0 0.0
      %270 = vmatpush1.xpose.msra.mxu0 0.0
      %271 = vmatprep.subr.mxu0 0.0
      %272 = vmatpush1.xpose.msra.mxu0 0.0
      %273 = vmatprep.subr.mxu0 0.0
      %274 = vmatpush1.xpose.msra.mxu0 0.0
      %275 = vmatprep.subr.mxu0 0.0
      %276 = vmatpush1.xpose.msra.mxu0 0.0
      %277 = vmatprep.subr.mxu0 0.0
      %278 = vmatpush1.xpose.msra.mxu0 0.0
      %279 = vmatprep.subr.mxu0 0.0
      %280 = vmatpush1.xpose.msra.mxu0 0.0
      %281 = vmatprep.subr.mxu0 0.0
      %282 = vmatpush1.xpose.msra.mxu0 0.0
      %283 = vmatprep.subr.mxu0 0.0
      %284 = vmatpush1.xpose.msra.mxu0 0.0
      %285 = vmatprep.subr.mxu0 0.0
      %286 = vmatpush1.xpose.msra.mxu0 0.0
      %287 = vmatprep.mubr.f32.mxu0 0.0
      %288 = vmatmul.mubr.f32.gmra.mrb[0].mxu0 %v221
      %v289 = vpop.f32.mrb[0].mxu0
      %v290 = vadd.f32 0.0, %v289
      %v291 = vpop.f32.mrb[0].mxu0
      %292 = vdwg.mxu0
      %v293 = vmul.f32 %v290, 0.125
      %v294 = vsel %vm122, %v293, -inf
      %295 = vmax.xlane.f32.xlu0 %v294
      %v296 = vpop.xlane.xlu0 %295
      %v297 = vsub.f32 %v293, %v296
      %v298 = vmul.f32 %v297, 1.442695
      %v299 = vpow.pop %v298
      %v300 = vsel %vm122, %v299, 0.0
      %301 = vadd.xlane.f32.xlu0 %v300
      %v302 = vpop.xlane.xlu0 %301
      %v303 = vrcp.pop %v302
      %v304 = vmul.f32 %v302, %v303
      %v305 = vsub.f32 2.0, %v304
      %v306 = vmul.f32 %v303, %v305
      %v307 = vmul.f32 %v299, %v306
      %v308 = vld [vmem:[#allocation3] sm:$0xff]
      %v309 = vsub.f32 %v307, %v308
      %v310 = vmul.f32 %v309, %v309
      %v311 = vsel %vm122, %v310, 0.0
      %312 = vadd.xlane.f32.xlu0 %v311
      %v313 = vpop.xlane.xlu0 %312
      %v314 = vrot.slane %v313, 4
      %v315 = vadd.f32 %v313, %v314
      %v316 = vrot.slane %v315, 2
      %v317 = vadd.f32 %v315, %v316
      %v318 = vrot.slane %v317, 1
      %v319 = vadd.f32 %v317, %v318
      %s320 = vtos %v319
      %v322 = vsel %vm122, %v307, 0
      %324 = vmatprep.subr.mxu0 0.0
      %325 = vmatpush1.msra.mxu0 %v38
      %326 = vmatprep.subr.mxu0 0.0
      %327 = vmatpush1.msra.mxu0 %v39
      %328 = vmatprep.subr.mxu0 0.0
      %329 = vmatpush1.msra.mxu0 0.0
      %330 = vmatprep.subr.mxu0 0.0
      %331 = vmatpush1.msra.mxu0 0.0
      %332 = vmatprep.subr.mxu0 0.0
      %333 = vmatpush1.msra.mxu0 0.0
      %334 = vmatprep.subr.mxu0 0.0
      %335 = vmatpush1.msra.mxu0 0.0
      %336 = vmatprep.subr.mxu0 0.0
      %337 = vmatpush1.msra.mxu0 0.0
      %338 = vmatprep.subr.mxu0 0.0
      %339 = vmatpush1.msra.mxu0 0.0
      %340 = vmatprep.subr.mxu0 0.0
      %341 = vmatpush1.msra.mxu0 0.0
      %342 = vmatprep.subr.mxu0 0.0
      %343 = vmatpush1.msra.mxu0 0.0
      %344 = vmatprep.subr.mxu0 0.0
      %345 = vmatpush1.msra.mxu0 0.0
      %346 = vmatprep.subr.mxu0 0.0
      %347 = vmatpush1.msra.mxu0 0.0
      %348 = vmatprep.subr.mxu0 0.0
      %349 = vmatpush1.msra.mxu0 0.0
      %350 = vmatprep.subr.mxu0 0.0
      %351 = vmatpush1.msra.mxu0 0.0
      %352 = vmatprep.subr.mxu0 0.0
      %353 = vmatpush1.msra.mxu0 0.0
      %354 = vmatprep.subr.mxu0 0.0
      %355 = vmatpush1.msra.mxu0 0.0
      %356 = vmatprep.subr.mxu0 0.0
      %357 = vmatpush1.msra.mxu0 0.0
      %358 = vmatprep.subr.mxu0 0.0
      %359 = vmatpush1.msra.mxu0 0.0
      %360 = vmatprep.subr.mxu0 0.0
      %361 = vmatpush1.msra.mxu0 0.0
      %362 = vmatprep.subr.mxu0 0.0
      %363 = vmatpush1.msra.mxu0 0.0
      %364 = vmatprep.subr.mxu0 0.0
      %365 = vmatpush1.msra.mxu0 0.0
      %366 = vmatprep.subr.mxu0 0.0
      %367 = vmatpush1.msra.mxu0 0.0
      %368 = vmatprep.subr.mxu0 0.0
      %369 = vmatpush1.msra.mxu0 0.0
      %370 = vmatprep.subr.mxu0 0.0
      %371 = vmatpush1.msra.mxu0 0.0
      %372 = vmatprep.subr.mxu0 0.0
      %373 = vmatpush1.msra.mxu0 0.0
      %374 = vmatprep.subr.mxu0 0.0
      %375 = vmatpush1.msra.mxu0 0.0
      %376 = vmatprep.subr.mxu0 0.0
      %377 = vmatpush1.msra.mxu0 0.0
      %378 = vmatprep.subr.mxu0 0.0
      %379 = vmatpush1.msra.mxu0 0.0
      %380 = vmatprep.subr.mxu0 0.0
      %381 = vmatpush1.msra.mxu0 0.0
      %382 = vmatprep.subr.mxu0 0.0
      %383 = vmatpush1.msra.mxu0 0.0
      %384 = vmatprep.subr.mxu0 0.0
      %385 = vmatpush1.msra.mxu0 0.0
      %386 = vmatprep.subr.mxu0 0.0
      %387 = vmatpush1.msra.mxu0 0.0
      %388 = vmatprep.mubr.f32.mxu0 0.0
      %389 = vmatmul.mubr.f32.gmra.mrb[0].mxu0 %v322
      %v390 = vpop.f32.mrb[0].mxu0
      %v391 = vadd.f32 0.0, %v390
      %v392 = vpop.f32.mrb[0].mxu0
      %393 = vdwg.mxu0
      %394 = vst.msk [vmem:[#allocation2] sm:$0xff] %vm41, %v391
      %395 = vst.msk [vmem:[#allocation3] sm:$0xff] %vm122, %v307
      %p396 = scmp.le.f32.partialorder %s320, 1e-10
      %s397 = scalar_select %p396, 1, 0
      %398 = sst [smem:[%s212]] %s397
    $region21: #{tpu_custom_call.1} parent=1 // pred_fallthru
      _
    %s399 = sld [smem:[#allocation4]]
    %p400 = scmp.eq.s32.totalorder %s399, 0
    // Predicated region
    $region22: #{tpu_custom_call.1} parent=1 // pred_check
      %p401 = pneg %p400
    $region23: #{tpu_custom_call.1} parent=1 // pred_check_branch
      %403 = sbr.rel (%p401) target = $region25
    $region24: #{tpu_custom_call.1} parent=1 // pred_region
      %v404 = vld [vmem:[#allocation2] sm:$0xff]
      %v406 = vsel %vm41, %v404, 0
      %408 = vmatprep.subr.mxu0 0.0
      %409 = vmatpush1.xpose.msra.mxu0 %v46
      %410 = vmatprep.subr.mxu0 0.0
      %411 = vmatpush1.xpose.msra.mxu0 %v49
      %412 = vmatprep.subr.mxu0 0.0
      %413 = vmatpush1.xpose.msra.mxu0 0.0
      %414 = vmatprep.subr.mxu0 0.0
      %415 = vmatpush1.xpose.msra.mxu0 0.0
      %416 = vmatprep.subr.mxu0 0.0
      %417 = vmatpush1.xpose.msra.mxu0 0.0
      %418 = vmatprep.subr.mxu0 0.0
      %419 = vmatpush1.xpose.msra.mxu0 0.0
      %420 = vmatprep.subr.mxu0 0.0
      %421 = vmatpush1.xpose.msra.mxu0 0.0
      %422 = vmatprep.subr.mxu0 0.0
      %423 = vmatpush1.xpose.msra.mxu0 0.0
      %424 = vmatprep.subr.mxu0 0.0
      %425 = vmatpush1.xpose.msra.mxu0 0.0
      %426 = vmatprep.subr.mxu0 0.0
      %427 = vmatpush1.xpose.msra.mxu0 0.0
      %428 = vmatprep.subr.mxu0 0.0
      %429 = vmatpush1.xpose.msra.mxu0 0.0
      %430 = vmatprep.subr.mxu0 0.0
      %431 = vmatpush1.xpose.msra.mxu0 0.0
      %432 = vmatprep.subr.mxu0 0.0
      %433 = vmatpush1.xpose.msra.mxu0 0.0
      %434 = vmatprep.subr.mxu0 0.0
      %435 = vmatpush1.xpose.msra.mxu0 0.0
      %436 = vmatprep.subr.mxu0 0.0
      %437 = vmatpush1.xpose.msra.mxu0 0.0
      %438 = vmatprep.subr.mxu0 0.0
      %439 = vmatpush1.xpose.msra.mxu0 0.0
      %440 = vmatprep.subr.mxu0 0.0
      %441 = vmatpush1.xpose.msra.mxu0 0.0
      %442 = vmatprep.subr.mxu0 0.0
      %443 = vmatpush1.xpose.msra.mxu0 0.0
      %444 = vmatprep.subr.mxu0 0.0
      %445 = vmatpush1.xpose.msra.mxu0 0.0
      %446 = vmatprep.subr.mxu0 0.0
      %447 = vmatpush1.xpose.msra.mxu0 0.0
      %448 = vmatprep.subr.mxu0 0.0
      %449 = vmatpush1.xpose.msra.mxu0 0.0
      %450 = vmatprep.subr.mxu0 0.0
      %451 = vmatpush1.xpose.msra.mxu0 0.0
      %452 = vmatprep.subr.mxu0 0.0
      %453 = vmatpush1.xpose.msra.mxu0 0.0
      %454 = vmatprep.subr.mxu0 0.0
      %455 = vmatpush1.xpose.msra.mxu0 0.0
      %456 = vmatprep.subr.mxu0 0.0
      %457 = vmatpush1.xpose.msra.mxu0 0.0
      %458 = vmatprep.subr.mxu0 0.0
      %459 = vmatpush1.xpose.msra.mxu0 0.0
      %460 = vmatprep.subr.mxu0 0.0
      %461 = vmatpush1.xpose.msra.mxu0 0.0
      %462 = vmatprep.subr.mxu0 0.0
      %463 = vmatpush1.xpose.msra.mxu0 0.0
      %464 = vmatprep.subr.mxu0 0.0
      %465 = vmatpush1.xpose.msra.mxu0 0.0
      %466 = vmatprep.subr.mxu0 0.0
      %467 = vmatpush1.xpose.msra.mxu0 0.0
      %468 = vmatprep.subr.mxu0 0.0
      %469 = vmatpush1.xpose.msra.mxu0 0.0
      %470 = vmatprep.subr.mxu0 0.0
      %471 = vmatpush1.xpose.msra.mxu0 0.0
      %472 = vmatprep.mubr.f32.mxu0 0.0
      %473 = vmatmul.mubr.f32.gmra.mrb[0].mxu0 %v406
      %v474 = vpop.f32.mrb[0].mxu0
      %v475 = vadd.f32 0.0, %v474
      %v476 = vpop.f32.mrb[0].mxu0
      %477 = vdwg.mxu0
      %v478 = vmul.f32 %v475, 0.125
      %v479 = vsel %vm122, %v478, -inf
      %480 = vmax.xlane.f32.xlu0 %v479
      %v481 = vpop.xlane.xlu0 %480
      %v482 = vsub.f32 %v478, %v481
      %v483 = vmul.f32 %v482, 1.442695
      %v484 = vpow.pop %v483
      %v485 = vsel %vm122, %v484, 0.0
      %486 = vadd.xlane.f32.xlu0 %v485
      %v487 = vpop.xlane.xlu0 %486
      %v488 = vrcp.pop %v487
      %v489 = vmul.f32 %v487, %v488
      %v490 = vsub.f32 2.0, %v489
      %v491 = vmul.f32 %v488, %v490
      %v492 = vmul.f32 %v484, %v491
      %v493 = vld [vmem:[#allocation3] sm:$0xff]
      %v494 = vsub.f32 %v492, %v493
      %v495 = vmul.f32 %v494, %v494
      %v496 = vsel %vm122, %v495, 0.0
      %497 = vadd.xlane.f32.xlu0 %v496
      %v498 = vpop.xlane.xlu0 %497
      %v499 = vrot.slane %v498, 4
      %v500 = vadd.f32 %v498, %v499
      %v501 = vrot.slane %v500, 2
      %v502 = vadd.f32 %v500, %v501
      %v503 = vrot.slane %v502, 1
      %v504 = vadd.f32 %v502, %v503
      %s505 = vtos %v504
      %v507 = vsel %vm122, %v492, 0
      %509 = vmatprep.subr.mxu0 0.0
      %510 = vmatpush1.msra.mxu0 %v38
      %511 = vmatprep.subr.mxu0 0.0
      %512 = vmatpush1.msra.mxu0 %v39
      %513 = vmatprep.subr.mxu0 0.0
      %514 = vmatpush1.msra.mxu0 0.0
      %515 = vmatprep.subr.mxu0 0.0
      %516 = vmatpush1.msra.mxu0 0.0
      %517 = vmatprep.subr.mxu0 0.0
      %518 = vmatpush1.msra.mxu0 0.0
      %519 = vmatprep.subr.mxu0 0.0
      %520 = vmatpush1.msra.mxu0 0.0
      %521 = vmatprep.subr.mxu0 0.0
      %522 = vmatpush1.msra.mxu0 0.0
      %523 = vmatprep.subr.mxu0 0.0
      %524 = vmatpush1.msra.mxu0 0.0
      %525 = vmatprep.subr.mxu0 0.0
      %526 = vmatpush1.msra.mxu0 0.0
      %527 = vmatprep.subr.mxu0 0.0
      %528 = vmatpush1.msra.mxu0 0.0
      %529 = vmatprep.subr.mxu0 0.0
      %530 = vmatpush1.msra.mxu0 0.0
      %531 = vmatprep.subr.mxu0 0.0
      %532 = vmatpush1.msra.mxu0 0.0
      %533 = vmatprep.subr.mxu0 0.0
      %534 = vmatpush1.msra.mxu0 0.0
      %535 = vmatprep.subr.mxu0 0.0
      %536 = vmatpush1.msra.mxu0 0.0
      %537 = vmatprep.subr.mxu0 0.0
      %538 = vmatpush1.msra.mxu0 0.0
      %539 = vmatprep.subr.mxu0 0.0
      %540 = vmatpush1.msra.mxu0 0.0
      %541 = vmatprep.subr.mxu0 0.0
      %542 = vmatpush1.msra.mxu0 0.0
      %543 = vmatprep.subr.mxu0 0.0
      %544 = vmatpush1.msra.mxu0 0.0
      %545 = vmatprep.subr.mxu0 0.0
      %546 = vmatpush1.msra.mxu0 0.0
      %547 = vmatprep.subr.mxu0 0.0
      %548 = vmatpush1.msra.mxu0 0.0
      %549 = vmatprep.subr.mxu0 0.0
      %550 = vmatpush1.msra.mxu0 0.0
      %551 = vmatprep.subr.mxu0 0.0
      %552 = vmatpush1.msra.mxu0 0.0
      %553 = vmatprep.subr.mxu0 0.0
      %554 = vmatpush1.msra.mxu0 0.0
      %555 = vmatprep.subr.mxu0 0.0
      %556 = vmatpush1.msra.mxu0 0.0
      %557 = vmatprep.subr.mxu0 0.0
      %558 = vmatpush1.msra.mxu0 0.0
      %559 = vmatprep.subr.mxu0 0.0
      %560 = vmatpush1.msra.mxu0 0.0
      %561 = vmatprep.subr.mxu0 0.0
      %562 = vmatpush1.msra.mxu0 0.0
      %563 = vmatprep.subr.mxu0 0.0
      %564 = vmatpush1.msra.mxu0 0.0
      %565 = vmatprep.subr.mxu0 0.0
      %566 = vmatpush1.msra.mxu0 0.0
      %567 = vmatprep.subr.mxu0 0.0
      %568 = vmatpush1.msra.mxu0 0.0
      %569 = vmatprep.subr.mxu0 0.0
      %570 = vmatpush1.msra.mxu0 0.0
      %571 = vmatprep.subr.mxu0 0.0
      %572 = vmatpush1.msra.mxu0 0.0
      %573 = vmatprep.mubr.f32.mxu0 0.0
      %574 = vmatmul.mubr.f32.gmra.mrb[0].mxu0 %v507
      %v575 = vpop.f32.mrb[0].mxu0
      %v576 = vadd.f32 0.0, %v575
      %v577 = vpop.f32.mrb[0].mxu0
      %578 = vdwg.mxu0
      %579 = vst.msk [vmem:[#allocation2] sm:$0xff] %vm41, %v576
      %580 = vst.msk [vmem:[#allocation3] sm:$0xff] %vm122, %v492
      %p581 = scmp.le.f32.partialorder %s505, 1e-10
      %s582 = scalar_select %p581, 1, 0
      %583 = sst [smem:[%s212]] %s582
    $region25: #{tpu_custom_call.1} parent=1 // pred_fallthru
      _
    %s584 = sld [smem:[#allocation4]]
    %p585 = scmp.eq.s32.totalorder %s584, 0
    // Predicated region
    $region26: #{tpu_custom_call.1} parent=1 // pred_check
      %p586 = pneg %p585
    $region27: #{tpu_custom_call.1} parent=1 // pred_check_branch
      %588 = sbr.rel (%p586) target = $region29
    $region28: #{tpu_custom_call.1} parent=1 // pred_region
      %v589 = vld [vmem:[#allocation2] sm:$0xff]
      %v591 = vsel %vm41, %v589, 0
      %593 = vmatprep.subr.mxu0 0.0
      %594 = vmatpush1.xpose.msra.mxu0 %v46
      %595 = vmatprep.subr.mxu0 0.0
      %596 = vmatpush1.xpose.msra.mxu0 %v49
      %597 = vmatprep.subr.mxu0 0.0
      %598 = vmatpush1.xpose.msra.mxu0 0.0
      %599 = vmatprep.subr.mxu0 0.0
      %600 = vmatpush1.xpose.msra.mxu0 0.0
      %601 = vmatprep.subr.mxu0 0.0
      %602 = vmatpush1.xpose.msra.mxu0 0.0
      %603 = vmatprep.subr.mxu0 0.0
      %604 = vmatpush1.xpose.msra.mxu0 0.0
      %605 = vmatprep.subr.mxu0 0.0
      %606 = vmatpush1.xpose.msra.mxu0 0.0
      %607 = vmatprep.subr.mxu0 0.0
      %608 = vmatpush1.xpose.msra.mxu0 0.0
      %609 = vmatprep.subr.mxu0 0.0
      %610 = vmatpush1.xpose.msra.mxu0 0.0
      %611 = vmatprep.subr.mxu0 0.0
      %612 = vmatpush1.xpose.msra.mxu0 0.0
      %613 = vmatprep.subr.mxu0 0.0
      %614 = vmatpush1.xpose.msra.mxu0 0.0
      %615 = vmatprep.subr.mxu0 0.0
      %616 = vmatpush1.xpose.msra.mxu0 0.0
      %617 = vmatprep.subr.mxu0 0.0
      %618 = vmatpush1.xpose.msra.mxu0 0.0
      %619 = vmatprep.subr.mxu0 0.0
      %620 = vmatpush1.xpose.msra.mxu0 0.0
      %621 = vmatprep.subr.mxu0 0.0
      %622 = vmatpush1.xpose.msra.mxu0 0.0
      %623 = vmatprep.subr.mxu0 0.0
      %624 = vmatpush1.xpose.msra.mxu0 0.0
      %625 = vmatprep.subr.mxu0 0.0
      %626 = vmatpush1.xpose.msra.mxu0 0.0
      %627 = vmatprep.subr.mxu0 0.0
      %628 = vmatpush1.xpose.msra.mxu0 0.0
      %629 = vmatprep.subr.mxu0 0.0
      %630 = vmatpush1.xpose.msra.mxu0 0.0
      %631 = vmatprep.subr.mxu0 0.0
      %632 = vmatpush1.xpose.msra.mxu0 0.0
      %633 = vmatprep.subr.mxu0 0.0
      %634 = vmatpush1.xpose.msra.mxu0 0.0
      %635 = vmatprep.subr.mxu0 0.0
      %636 = vmatpush1.xpose.msra.mxu0 0.0
      %637 = vmatprep.subr.mxu0 0.0
      %638 = vmatpush1.xpose.msra.mxu0 0.0
      %639 = vmatprep.subr.mxu0 0.0
      %640 = vmatpush1.xpose.msra.mxu0 0.0
      %641 = vmatprep.subr.mxu0 0.0
      %642 = vmatpush1.xpose.msra.mxu0 0.0
      %643 = vmatprep.subr.mxu0 0.0
      %644 = vmatpush1.xpose.msra.mxu0 0.0
      %645 = vmatprep.subr.mxu0 0.0
      %646 = vmatpush1.xpose.msra.mxu0 0.0
      %647 = vmatprep.subr.mxu0 0.0
      %648 = vmatpush1.xpose.msra.mxu0 0.0
      %649 = vmatprep.subr.mxu0 0.0
      %650 = vmatpush1.xpose.msra.mxu0 0.0
      %651 = vmatprep.subr.mxu0 0.0
      %652 = vmatpush1.xpose.msra.mxu0 0.0
      %653 = vmatprep.subr.mxu0 0.0
      %654 = vmatpush1.xpose.msra.mxu0 0.0
      %655 = vmatprep.subr.mxu0 0.0
      %656 = vmatpush1.xpose.msra.mxu0 0.0
      %657 = vmatprep.mubr.f32.mxu0 0.0
      %658 = vmatmul.mubr.f32.gmra.mrb[0].mxu0 %v591
      %v659 = vpop.f32.mrb[0].mxu0
      %v660 = vadd.f32 0.0, %v659
      %v661 = vpop.f32.mrb[0].mxu0
      %662 = vdwg.mxu0
      %v663 = vmul.f32 %v660, 0.125
      %v664 = vsel %vm122, %v663, -inf
      %665 = vmax.xlane.f32.xlu0 %v664
      %v666 = vpop.xlane.xlu0 %665
      %v667 = vsub.f32 %v663, %v666
      %v668 = vmul.f32 %v667, 1.442695
      %v669 = vpow.pop %v668
      %v670 = vsel %vm122, %v669, 0.0
      %671 = vadd.xlane.f32.xlu0 %v670
      %v672 = vpop.xlane.xlu0 %671
      %v673 = vrcp.pop %v672
      %v674 = vmul.f32 %v672, %v673
      %v675 = vsub.f32 2.0, %v674
      %v676 = vmul.f32 %v673, %v675
      %v677 = vmul.f32 %v669, %v676
      %v678 = vld [vmem:[#allocation3] sm:$0xff]
      %v679 = vsub.f32 %v677, %v678
      %v680 = vmul.f32 %v679, %v679
      %v681 = vsel %vm122, %v680, 0.0
      %682 = vadd.xlane.f32.xlu0 %v681
      %v683 = vpop.xlane.xlu0 %682
      %v684 = vrot.slane %v683, 4
      %v685 = vadd.f32 %v683, %v684
      %v686 = vrot.slane %v685, 2
      %v687 = vadd.f32 %v685, %v686
      %v688 = vrot.slane %v687, 1
      %v689 = vadd.f32 %v687, %v688
      %s690 = vtos %v689
      %v692 = vsel %vm122, %v677, 0
      %694 = vmatprep.subr.mxu0 0.0
      %695 = vmatpush1.msra.mxu0 %v38
      %696 = vmatprep.subr.mxu0 0.0
      %697 = vmatpush1.msra.mxu0 %v39
      %698 = vmatprep.subr.mxu0 0.0
      %699 = vmatpush1.msra.mxu0 0.0
      %700 = vmatprep.subr.mxu0 0.0
      %701 = vmatpush1.msra.mxu0 0.0
      %702 = vmatprep.subr.mxu0 0.0
      %703 = vmatpush1.msra.mxu0 0.0
      %704 = vmatprep.subr.mxu0 0.0
      %705 = vmatpush1.msra.mxu0 0.0
      %706 = vmatprep.subr.mxu0 0.0
      %707 = vmatpush1.msra.mxu0 0.0
      %708 = vmatprep.subr.mxu0 0.0
      %709 = vmatpush1.msra.mxu0 0.0
      %710 = vmatprep.subr.mxu0 0.0
      %711 = vmatpush1.msra.mxu0 0.0
      %712 = vmatprep.subr.mxu0 0.0
      %713 = vmatpush1.msra.mxu0 0.0
      %714 = vmatprep.subr.mxu0 0.0
      %715 = vmatpush1.msra.mxu0 0.0
      %716 = vmatprep.subr.mxu0 0.0
      %717 = vmatpush1.msra.mxu0 0.0
      %718 = vmatprep.subr.mxu0 0.0
      %719 = vmatpush1.msra.mxu0 0.0
      %720 = vmatprep.subr.mxu0 0.0
      %721 = vmatpush1.msra.mxu0 0.0
      %722 = vmatprep.subr.mxu0 0.0
      %723 = vmatpush1.msra.mxu0 0.0
      %724 = vmatprep.subr.mxu0 0.0
      %725 = vmatpush1.msra.mxu0 0.0
      %726 = vmatprep.subr.mxu0 0.0
      %727 = vmatpush1.msra.mxu0 0.0
      %728 = vmatprep.subr.mxu0 0.0
      %729 = vmatpush1.msra.mxu0 0.0
      %730 = vmatprep.subr.mxu0 0.0
      %731 = vmatpush1.msra.mxu0 0.0
      %732 = vmatprep.subr.mxu0 0.0
      %733 = vmatpush1.msra.mxu0 0.0
      %734 = vmatprep.subr.mxu0 0.0
      %735 = vmatpush1.msra.mxu0 0.0
      %736 = vmatprep.subr.mxu0 0.0
      %737 = vmatpush1.msra.mxu0 0.0
      %738 = vmatprep.subr.mxu0 0.0
      %739 = vmatpush1.msra.mxu0 0.0
      %740 = vmatprep.subr.mxu0 0.0
      %741 = vmatpush1.msra.mxu0 0.0
      %742 = vmatprep.subr.mxu0 0.0
      %743 = vmatpush1.msra.mxu0 0.0
      %744 = vmatprep.subr.mxu0 0.0
      %745 = vmatpush1.msra.mxu0 0.0
      %746 = vmatprep.subr.mxu0 0.0
      %747 = vmatpush1.msra.mxu0 0.0
      %748 = vmatprep.subr.mxu0 0.0
      %749 = vmatpush1.msra.mxu0 0.0
      %750 = vmatprep.subr.mxu0 0.0
      %751 = vmatpush1.msra.mxu0 0.0
      %752 = vmatprep.subr.mxu0 0.0
      %753 = vmatpush1.msra.mxu0 0.0
      %754 = vmatprep.subr.mxu0 0.0
      %755 = vmatpush1.msra.mxu0 0.0
      %756 = vmatprep.subr.mxu0 0.0
      %757 = vmatpush1.msra.mxu0 0.0
      %758 = vmatprep.mubr.f32.mxu0 0.0
      %759 = vmatmul.mubr.f32.gmra.mrb[0].mxu0 %v692
      %v760 = vpop.f32.mrb[0].mxu0
      %v761 = vadd.f32 0.0, %v760
      %v762 = vpop.f32.mrb[0].mxu0
      %763 = vdwg.mxu0
      %764 = vst.msk [vmem:[#allocation2] sm:$0xff] %vm41, %v761
      %765 = vst.msk [vmem:[#allocation3] sm:$0xff] %vm122, %v677
      %p766 = scmp.le.f32.partialorder %s690, 1e-10
      %s767 = scalar_select %p766, 1, 0
      %768 = sst [smem:[%s212]] %s767
    $region29: #{tpu_custom_call.1} parent=1 // pred_fallthru
      _
    %v769 = vld [vmem:[#allocation2] sm:$0xff]
    %v770 = vmul.f32 %v769, %v769
    %v771 = vsel %vm41, %v770, 0.0
    %772 = vadd.xlane.f32.xlu0 %v771
    %v773 = vpop.xlane.xlu0 %772
    %v774 = vadd.f32 %v773, 1e-24
    %v775 = vrsqrt.pop %v774
    %v776 = vmul.f32 %v38, %v38
    %v777 = vmul.f32 %v39, %v39
    %v778 = vsel %vm41, %v776, 0.0
    %779 = vadd.xlane.f32.xlu0 %v778
    %v780 = vpop.xlane.xlu0 %779
    %v781 = vsel %vm41, %v777, 0.0
    %782 = vadd.xlane.f32.xlu0 %v781
    %v783 = vpop.xlane.xlu0 %782
    %v784 = vadd.f32 %v780, 1e-24
    %v785 = vadd.f32 %v783, 1e-24
    %v786 = vrsqrt.pop %v784
    %v787 = vrsqrt.pop %v785
    %v788 = vmul.f32 %v769, %v775
    %v789 = vmul.f32 %v38, %v786
    %v790 = vmul.f32 %v39, %v787
    %v792 = vsel %vm41, %v788, 0
    %v795 = vsel %vm41, %v789, 0
    %v798 = vsel %vm41, %v790, 0
    %800 = vmatprep.subr.mxu0 0.0
    %801 = vmatpush1.xpose.msra.mxu0 %v795
    %802 = vmatprep.subr.mxu0 0.0
    %803 = vmatpush1.xpose.msra.mxu0 %v798
    %804 = vmatprep.subr.mxu0 0.0
    %805 = vmatpush1.xpose.msra.mxu0 0.0
    %806 = vmatprep.subr.mxu0 0.0
    %807 = vmatpush1.xpose.msra.mxu0 0.0
    %808 = vmatprep.subr.mxu0 0.0
    %809 = vmatpush1.xpose.msra.mxu0 0.0
    %810 = vmatprep.subr.mxu0 0.0
    %811 = vmatpush1.xpose.msra.mxu0 0.0
    %812 = vmatprep.subr.mxu0 0.0
    %813 = vmatpush1.xpose.msra.mxu0 0.0
    %814 = vmatprep.subr.mxu0 0.0
    %815 = vmatpush1.xpose.msra.mxu0 0.0
    %816 = vmatprep.subr.mxu0 0.0
    %817 = vmatpush1.xpose.msra.mxu0 0.0
    %818 = vmatprep.subr.mxu0 0.0
    %819 = vmatpush1.xpose.msra.mxu0 0.0
    %820 = vmatprep.subr.mxu0 0.0
    %821 = vmatpush1.xpose.msra.mxu0 0.0
    %822 = vmatprep.subr.mxu0 0.0
    %823 = vmatpush1.xpose.msra.mxu0 0.0
    %824 = vmatprep.subr.mxu0 0.0
    %825 = vmatpush1.xpose.msra.mxu0 0.0
    %826 = vmatprep.subr.mxu0 0.0
    %827 = vmatpush1.xpose.msra.mxu0 0.0
    %828 = vmatprep.subr.mxu0 0.0
    %829 = vmatpush1.xpose.msra.mxu0 0.0
    %830 = vmatprep.subr.mxu0 0.0
    %831 = vmatpush1.xpose.msra.mxu0 0.0
    %832 = vmatprep.subr.mxu0 0.0
    %833 = vmatpush1.xpose.msra.mxu0 0.0
    %834 = vmatprep.subr.mxu0 0.0
    %835 = vmatpush1.xpose.msra.mxu0 0.0
    %836 = vmatprep.subr.mxu0 0.0
    %837 = vmatpush1.xpose.msra.mxu0 0.0
    %838 = vmatprep.subr.mxu0 0.0
    %839 = vmatpush1.xpose.msra.mxu0 0.0
    %840 = vmatprep.subr.mxu0 0.0
    %841 = vmatpush1.xpose.msra.mxu0 0.0
    %842 = vmatprep.subr.mxu0 0.0
    %843 = vmatpush1.xpose.msra.mxu0 0.0
    %844 = vmatprep.subr.mxu0 0.0
    %845 = vmatpush1.xpose.msra.mxu0 0.0
    %846 = vmatprep.subr.mxu0 0.0
    %847 = vmatpush1.xpose.msra.mxu0 0.0
    %848 = vmatprep.subr.mxu0 0.0
    %849 = vmatpush1.xpose.msra.mxu0 0.0
    %850 = vmatprep.subr.mxu0 0.0
    %851 = vmatpush1.xpose.msra.mxu0 0.0
    %852 = vmatprep.subr.mxu0 0.0
    %853 = vmatpush1.xpose.msra.mxu0 0.0
    %854 = vmatprep.subr.mxu0 0.0
    %855 = vmatpush1.xpose.msra.mxu0 0.0
    %856 = vmatprep.subr.mxu0 0.0
    %857 = vmatpush1.xpose.msra.mxu0 0.0
    %858 = vmatprep.subr.mxu0 0.0
    %859 = vmatpush1.xpose.msra.mxu0 0.0
    %860 = vmatprep.subr.mxu0 0.0
    %861 = vmatpush1.xpose.msra.mxu0 0.0
    %862 = vmatprep.subr.mxu0 0.0
    %863 = vmatpush1.xpose.msra.mxu0 0.0
    %864 = vmatprep.mubr.f32.mxu0 0.0
    %865 = vmatmul.mubr.f32.gmra.mrb[0].mxu0 %v792
    %v866 = vpop.f32.mrb[0].mxu0
    %v867 = vadd.f32 0.0, %v866
    %v868 = vpop.f32.mrb[0].mxu0
    %869 = vdwg.mxu0
    %870 = vst.msk [vmem:[#allocation10] sm:$0xff] %vm122, %v867
    // Predicated region
    $region30: #{tpu_custom_call.1} parent=1 // pred_check
      _
    $region31: #{tpu_custom_call.1} parent=1 // pred_check_branch
      %872 = sbr.rel (0) target = $region33
    $region32: #{tpu_custom_call.1} parent=1 // pred_region
      %s874 = ssub.s32 128, 128
      %875 = vsyncadd [#allocation7], %s874
      %s877 = sshll.u32 [#allocation10], 4
      %s878 = int_to_ptr.vmem [resolvable:$true] %s877
      %880 = dma.vmem_to_hbm [thread:$0]  %s878, 128, %s2, [#allocation7]
    $region33: #{tpu_custom_call.1} parent=1 // pred_fallthru
      _
    // Predicated region
    $region34: #{tpu_custom_call.1} parent=1 // pred_check
      _
    $region35: #{tpu_custom_call.1} parent=1 // pred_check_branch
      %882 = sbr.rel (0) target = $region37
    $region36: #{tpu_custom_call.1} parent=1 // pred_region
      %883 = dma.done [#allocation7], 128
    $region37: #{tpu_custom_call.1} parent=1 // pred_fallthru
      _
    %884 = vsyncpa [#allocation6], 1
    %885 = vsyncpa [#allocation9], 1
    %886 = vsyncpa [#allocation7], 1

</llo_original>
